<compile_context>
chip_gen: v7x
topology: tpu7x:2x2x1
jax: 0.10.0
libtpu: 0.0.40
codegen_flags: <defaults>
</compile_context>

<pallas_src>
from functools import partial

import jax
import jax.numpy as jnp
from jax.experimental import pallas as pl
from jax.experimental.pallas import tpu as pltpu


def _macro_mae_kernel(inp_ref, tgt_ref, sums_ref, cnts_ref, *,
                      n_classes, block_rows, rows, nb_half):
    core = pl.program_id(0)   # size-2 "parallel" axis (2 TCs on v7x)
    step = pl.program_id(1)   # "arbitrary" reduction axis over row-blocks

    # Zero this core's resident accumulators on its first reduction step.
    @pl.when(step == 0)
    def _():
        sums_ref[...] = jnp.zeros_like(sums_ref)
        cnts_ref[...] = jnp.zeros_like(cnts_ref)

    lane = 128
    x = inp_ref[...]                              # (block_rows, 128) f32
    t = tgt_ref[...].astype(jnp.int32)            # widened from int8

    # Row-level tail mask: rows at/after `rows` in this logical block are
    # garbage (partial last block, or the clamped duplicate block that the
    # second core-half reads when the number of row-blocks is odd).
    base = (core * nb_half + step) * block_rows   # traced scalar
    row = jax.lax.broadcasted_iota(jnp.int32, (block_rows, lane), 0)
    valid = row < (rows - base)

    t = jnp.where(valid, t, -1)                   # -1 never matches any class
    absdiff = jnp.where(valid, jnp.abs(x - t.astype(jnp.float32)), 0.0)

    # Unrolled per-class masked accumulation.  Temps stay (block_rows, 128);
    # one f32 mask per class is reused for both the sum and the count.
    s_parts, c_parts = [], []
    for c in range(n_classes):
        mf = (t == c).astype(jnp.float32)
        s_parts.append(jnp.sum(mf * absdiff, axis=0, keepdims=True))  # (1,128)
        c_parts.append(jnp.sum(mf, axis=0, keepdims=True))            # (1,128)
    # Note: counts accumulate in f32 (exact up to 2^24 per lane/class/core).
    sums_ref[...] += jnp.concatenate(s_parts, axis=0)                 # (C,128)
    cnts_ref[...] += jnp.concatenate(c_parts, axis=0)                 # (C,128)


def macro_average_mae_loss(inputs, targets, n_classes, block_rows=1024):
    """Pallas implementation of MacroAverageMAELoss.forward."""
    lane = 128
    inp = inputs.reshape(-1).astype(jnp.float32)
    tgt_dtype = jnp.int8 if n_classes <= 127 else jnp.int32
    tgt = targets.reshape(-1).astype(tgt_dtype)

    n = inp.shape[0]
    rows = (n + lane - 1) // lane
    padded = rows * lane
    if padded != n:
        # Tiny lane-tail pad only (<128 elements); sentinel -1 keeps padded
        # targets out of every class.  No block-sized padding is ever done.
        inp = jnp.pad(inp, (0, padded - n))
        tgt = jnp.pad(tgt, (0, padded - n), constant_values=-1)
    inp2 = inp.reshape(rows, lane)
    tgt2 = tgt.reshape(rows, lane)

    # Streaming tile height: big for throughput, clamped for tiny inputs,
    # multiple of 32 so int8 target tiles stay aligned.
    br = min(block_rows, ((rows + 31) // 32) * 32)
    br = max(32, (br // 32) * 32)
    nb = (rows + br - 1) // br            # number of logical row-blocks
    nb_half = (nb + 1) // 2               # per-core share of row-blocks

    def row_block_map(core, j):
        # Clamp so the DMA never starts past the array; the duplicated block
        # (odd nb, second core) is fully masked out in-kernel via `rows`.
        return (jnp.minimum(core * nb_half + j, nb - 1), 0)

    out_shape = (
        jax.ShapeDtypeStruct((2, n_classes, lane), jnp.float32),  # |diff| sums
        jax.ShapeDtypeStruct((2, n_classes, lane), jnp.float32),  # counts
    )

    sums, cnts = pl.pallas_call(
        partial(_macro_mae_kernel, n_classes=n_classes, block_rows=br,
                rows=rows, nb_half=nb_half),
        out_shape=out_shape,
        grid_spec=pltpu.PrefetchScalarGridSpec(
            num_scalar_prefetch=0,
            grid=(2, nb_half),
            in_specs=[
                pl.BlockSpec((br, lane), row_block_map),
                pl.BlockSpec((br, lane), row_block_map),
            ],
            out_specs=[
                pl.BlockSpec((None, n_classes, lane), lambda core, j: (core, 0, 0)),
                pl.BlockSpec((None, n_classes, lane), lambda core, j: (core, 0, 0)),
            ],
        ),
        compiler_params=pltpu.CompilerParams(
            dimension_semantics=("parallel", "arbitrary"),
            vmem_limit_bytes=32 * 1024 * 1024),
    )(inp2, tgt2)

    # Tiny O(C) finalize in plain JAX: per-class mean, then macro average.
    s = jnp.sum(sums, axis=(0, 2))                        # (C,)
    cnt = jnp.sum(cnts, axis=(0, 2))                      # (C,)
    class_mae = jnp.where(cnt > 0, s / jnp.maximum(cnt, 1.0), 0.0)
    return jnp.sum(class_mae) / jnp.float32(n_classes)


def _reference_loss(inputs, targets, n_classes):
    """Pure-JAX reference matching the PyTorch module."""
    x = inputs.reshape(-1).astype(jnp.float32)
    t = targets.reshape(-1).astype(jnp.int32)
    absdiff = jnp.abs(x - t.astype(jnp.float32))
    total = 0.0
    for c in range(n_classes):
        m = (t == c)
        cnt = jnp.sum(m.astype(jnp.float32))
        s = jnp.sum(jnp.where(m, absdiff, 0.0))
        total = total + jnp.where(cnt > 0, s / jnp.maximum(cnt, 1.0), 0.0)
    return total / n_classes


if __name__ == "__main__":
    n_classes = 4
    key = jax.random.PRNGKey(0)
    k_in, k_tgt = jax.random.split(key)

    # inputs: regression-style predictions; targets: integer class labels (NCHW).
    inputs = jax.random.uniform(k_in, (2, 4, 16, 16), jnp.float32) * (n_classes - 1)
    targets = jax.random.randint(k_tgt, (2, 4, 16, 16), 0, n_classes, jnp.int32)

    loss = macro_average_mae_loss(inputs, targets, n_classes)
    loss = jax.block_until_ready(loss)

    ref = jax.block_until_ready(_reference_loss(inputs, targets, n_classes))
    assert jnp.allclose(loss, ref, rtol=1e-5, atol=1e-5), (loss, ref)

    print("KERNEL_OK")
</pallas_src>

<mosaic_0001>
module attributes {stable_mosaic.version = 11 : i64} {
  func.func @_macro_mae_kernel(%arg0: i32, %arg1: i32, %arg2: memref<32x128xf32, #tpu.memory_space<vmem>>, %arg3: memref<32x128xi8, #tpu.memory_space<vmem>>, %arg4: memref<1x4x128xf32, #tpu.memory_space<vmem>>, %arg5: memref<1x4x128xf32, #tpu.memory_space<vmem>>) attributes {dimension_semantics = [#tpu.dimension_semantics<parallel>, #tpu.dimension_semantics<arbitrary>], iteration_bounds = array<i64: 2, 1>, scalar_prefetch = 0 : i64, scratch_operands = 0 : i64, tpu.core_type = #tpu.core_type<tc>, window_params = [{transform_indices = @transform_0, window_bounds = array<i64: 32, 128>}, {transform_indices = @transform_1, window_bounds = array<i64: 32, 128>}, {transform_indices = @transform_2, window_bounds = array<i64: 1, 4, 128>}, {transform_indices = @transform_3, window_bounds = array<i64: 1, 4, 128>}]} {
    %c0_i32 = arith.constant 0 : i32
    %0 = arith.cmpi eq, %arg1, %c0_i32 : i32
    %1 = arith.extui %0 : i1 to i32
    %c0_i32_0 = arith.constant 0 : i32
    %2 = arith.cmpi ne, %1, %c0_i32_0 : i32
    scf.if %2 {
      %cst_26 = arith.constant 0.000000e+00 : f32
      %70 = vector.broadcast %cst_26 : f32 to vector<4x128xf32>
      %c0_27 = arith.constant 0 : index
      %c0_28 = arith.constant 0 : index
      %c0_29 = arith.constant 0 : index
      %71 = vector.load %arg4[%c0_27, %c0_28, %c0_29] : memref<1x4x128xf32, #tpu.memory_space<vmem>>, vector<1x4x128xf32>
      %72 = vector.shape_cast %71 : vector<1x4x128xf32> to vector<4x128xf32>
      %73 = vector.shape_cast %70 : vector<4x128xf32> to vector<1x4x128xf32>
      tpu.vector_store %arg4[%c0_27, %c0_28, %c0_29], %73 {strides = array<i32>} : memref<1x4x128xf32, #tpu.memory_space<vmem>>, vector<1x4x128xf32>,
      %cst_30 = arith.constant 0.000000e+00 : f32
      %74 = vector.broadcast %cst_30 : f32 to vector<4x128xf32>
      %c0_31 = arith.constant 0 : index
      %c0_32 = arith.constant 0 : index
      %c0_33 = arith.constant 0 : index
      %75 = vector.load %arg5[%c0_31, %c0_32, %c0_33] : memref<1x4x128xf32, #tpu.memory_space<vmem>>, vector<1x4x128xf32>
      %76 = vector.shape_cast %75 : vector<1x4x128xf32> to vector<4x128xf32>
      %77 = vector.shape_cast %74 : vector<4x128xf32> to vector<1x4x128xf32>
      tpu.vector_store %arg5[%c0_31, %c0_32, %c0_33], %77 {strides = array<i32>} : memref<1x4x128xf32, #tpu.memory_space<vmem>>, vector<1x4x128xf32>,
    } else {
    }
    %c0 = arith.constant 0 : index
    %c0_1 = arith.constant 0 : index
    %3 = vector.load %arg2[%c0, %c0_1] : memref<32x128xf32, #tpu.memory_space<vmem>>, vector<32x128xf32>
    %c0_2 = arith.constant 0 : index
    %c0_3 = arith.constant 0 : index
    %4 = vector.load %arg3[%c0_2, %c0_3] : memref<32x128xi8, #tpu.memory_space<vmem>>, vector<32x128xi8>
    %5 = arith.extsi %4 : vector<32x128xi8> to vector<32x128xi32>
    %c1_i32 = arith.constant 1 : i32
    %6 = arith.muli %arg0, %c1_i32 : i32
    %7 = arith.addi %6, %arg1 : i32
    %c32_i32 = arith.constant 32 : i32
    %8 = arith.muli %7, %c32_i32 : i32
    %9 = tpu.iota {dimensions = array<i32: 0>} : vector<32x128xi32>
    %c16_i32 = arith.constant 16 : i32
    %10 = arith.subi %c16_i32, %8 : i32
    %11 = vector.broadcast %10 : i32 to vector<32x128xi32>
    %12 = arith.cmpi slt, %9, %11 : vector<32x128xi32>
    %c-1_i32 = arith.constant -1 : i32
    %13 = vector.broadcast %c-1_i32 : i32 to vector<32x128xi32>
    %14 = arith.select %12, %5, %13 : vector<32x128xi1>, vector<32x128xi32>
    %15 = arith.sitofp %14 : vector<32x128xi32> to vector<32x128xf32>
    %16 = arith.subf %3, %15 : vector<32x128xf32>
    %17 = math.absf %16 : vector<32x128xf32>
    %cst = arith.constant 0.000000e+00 : f32
    %18 = vector.broadcast %cst : f32 to vector<32x128xf32>
    %19 = arith.select %12, %17, %18 : vector<32x128xi1>, vector<32x128xf32>
    %c0_i32_4 = arith.constant 0 : i32
    %20 = vector.broadcast %c0_i32_4 : i32 to vector<32x128xi32>
    %21 = arith.cmpi eq, %14, %20 : vector<32x128xi32>
    %22 = arith.extui %21 : vector<32x128xi1> to vector<32x128xi32>
    %23 = arith.sitofp %22 : vector<32x128xi32> to vector<32x128xf32>
    %24 = arith.mulf %23, %19 : vector<32x128xf32>
    %cst_5 = arith.constant dense<0.000000e+00> : vector<128xf32>
    %25 = vector.multi_reduction <add>, %24, %cst_5 [0] : vector<32x128xf32> to vector<128xf32>
    %26 = vector.shape_cast %25 : vector<128xf32> to vector<1x128xf32>
    %cst_6 = arith.constant dense<0.000000e+00> : vector<128xf32>
    %27 = vector.multi_reduction <add>, %23, %cst_6 [0] : vector<32x128xf32> to vector<128xf32>
    %28 = vector.shape_cast %27 : vector<128xf32> to vector<1x128xf32>
    %c1_i32_7 = arith.constant 1 : i32
    %29 = vector.broadcast %c1_i32_7 : i32 to vector<32x128xi32>
    %30 = arith.cmpi eq, %14, %29 : vector<32x128xi32>
    %31 = arith.extui %30 : vector<32x128xi1> to vector<32x128xi32>
    %32 = arith.sitofp %31 : vector<32x128xi32> to vector<32x128xf32>
    %33 = arith.mulf %32, %19 : vector<32x128xf32>
    %cst_8 = arith.constant dense<0.000000e+00> : vector<128xf32>
    %34 = vector.multi_reduction <add>, %33, %cst_8 [0] : vector<32x128xf32> to vector<128xf32>
    %35 = vector.shape_cast %34 : vector<128xf32> to vector<1x128xf32>
    %cst_9 = arith.constant dense<0.000000e+00> : vector<128xf32>
    %36 = vector.multi_reduction <add>, %32, %cst_9 [0] : vector<32x128xf32> to vector<128xf32>
    %37 = vector.shape_cast %36 : vector<128xf32> to vector<1x128xf32>
    %c2_i32 = arith.constant 2 : i32
    %38 = vector.broadcast %c2_i32 : i32 to vector<32x128xi32>
    %39 = arith.cmpi eq, %14, %38 : vector<32x128xi32>
    %40 = arith.extui %39 : vector<32x128xi1> to vector<32x128xi32>
    %41 = arith.sitofp %40 : vector<32x128xi32> to vector<32x128xf32>
    %42 = arith.mulf %41, %19 : vector<32x128xf32>
    %cst_10 = arith.constant dense<0.000000e+00> : vector<128xf32>
    %43 = vector.multi_reduction <add>, %42, %cst_10 [0] : vector<32x128xf32> to vector<128xf32>
    %44 = vector.shape_cast %43 : vector<128xf32> to vector<1x128xf32>
    %cst_11 = arith.constant dense<0.000000e+00> : vector<128xf32>
    %45 = vector.multi_reduction <add>, %41, %cst_11 [0] : vector<32x128xf32> to vector<128xf32>
    %46 = vector.shape_cast %45 : vector<128xf32> to vector<1x128xf32>
    %c3_i32 = arith.constant 3 : i32
    %47 = vector.broadcast %c3_i32 : i32 to vector<32x128xi32>
    %48 = arith.cmpi eq, %14, %47 : vector<32x128xi32>
    %49 = arith.extui %48 : vector<32x128xi1> to vector<32x128xi32>
    %50 = arith.sitofp %49 : vector<32x128xi32> to vector<32x128xf32>
    %51 = arith.mulf %50, %19 : vector<32x128xf32>
    %cst_12 = arith.constant dense<0.000000e+00> : vector<128xf32>
    %52 = vector.multi_reduction <add>, %51, %cst_12 [0] : vector<32x128xf32> to vector<128xf32>
    %53 = vector.shape_cast %52 : vector<128xf32> to vector<1x128xf32>
    %cst_13 = arith.constant dense<0.000000e+00> : vector<128xf32>
    %54 = vector.multi_reduction <add>, %50, %cst_13 [0] : vector<32x128xf32> to vector<128xf32>
    %55 = vector.shape_cast %54 : vector<128xf32> to vector<1x128xf32>
    %c0_14 = arith.constant 0 : index
    %c0_15 = arith.constant 0 : index
    %c0_16 = arith.constant 0 : index
    %56 = vector.load %arg4[%c0_14, %c0_15, %c0_16] : memref<1x4x128xf32, #tpu.memory_space<vmem>>, vector<1x4x128xf32>
    %57 = vector.shape_cast %56 : vector<1x4x128xf32> to vector<4x128xf32>
    %58 = tpu.concatenate %26, %35, %44, %53 in 0 : vector<1x128xf32>, vector<1x128xf32>, vector<1x128xf32>, vector<1x128xf32> -> vector<4x128xf32>
    %59 = arith.addf %57, %58 : vector<4x128xf32>
    %c0_17 = arith.constant 0 : index
    %c0_18 = arith.constant 0 : index
    %c0_19 = arith.constant 0 : index
    %60 = vector.load %arg4[%c0_17, %c0_18, %c0_19] : memref<1x4x128xf32, #tpu.memory_space<vmem>>, vector<1x4x128xf32>
    %61 = vector.shape_cast %60 : vector<1x4x128xf32> to vector<4x128xf32>
    %62 = vector.shape_cast %59 : vector<4x128xf32> to vector<1x4x128xf32>
    tpu.vector_store %arg4[%c0_17, %c0_18, %c0_19], %62 {strides = array<i32>} : memref<1x4x128xf32, #tpu.memory_space<vmem>>, vector<1x4x128xf32>,
    %c0_20 = arith.constant 0 : index
    %c0_21 = arith.constant 0 : index
    %c0_22 = arith.constant 0 : index
    %63 = vector.load %arg5[%c0_20, %c0_21, %c0_22] : memref<1x4x128xf32, #tpu.memory_space<vmem>>, vector<1x4x128xf32>
    %64 = vector.shape_cast %63 : vector<1x4x128xf32> to vector<4x128xf32>
    %65 = tpu.concatenate %28, %37, %46, %55 in 0 : vector<1x128xf32>, vector<1x128xf32>, vector<1x128xf32>, vector<1x128xf32> -> vector<4x128xf32>
    %66 = arith.addf %64, %65 : vector<4x128xf32>
    %c0_23 = arith.constant 0 : index
    %c0_24 = arith.constant 0 : index
    %c0_25 = arith.constant 0 : index
    %67 = vector.load %arg5[%c0_23, %c0_24, %c0_25] : memref<1x4x128xf32, #tpu.memory_space<vmem>>, vector<1x4x128xf32>
    %68 = vector.shape_cast %67 : vector<1x4x128xf32> to vector<4x128xf32>
    %69 = vector.shape_cast %66 : vector<4x128xf32> to vector<1x4x128xf32>
    tpu.vector_store %arg5[%c0_23, %c0_24, %c0_25], %69 {strides = array<i32>} : memref<1x4x128xf32, #tpu.memory_space<vmem>>, vector<1x4x128xf32>,
    return
  }
  func.func @transform_0(%arg0: i32, %arg1: i32) -> (i32, i32) {
    %c1_i32 = arith.constant 1 : i32
    %0 = arith.muli %arg0, %c1_i32 : i32
    %1 = arith.addi %0, %arg1 : i32
    %c0_i32 = arith.constant 0 : i32
    %2 = arith.minsi %1, %c0_i32 : i32
    %c0_i32_0 = arith.constant 0 : i32
    %c0_i32_1 = arith.constant 0 : i32
    return %2, %c0_i32_0 : i32, i32
  }
  func.func @transform_1(%arg0: i32, %arg1: i32) -> (i32, i32) {
    %c1_i32 = arith.constant 1 : i32
    %0 = arith.muli %arg0, %c1_i32 : i32
    %1 = arith.addi %0, %arg1 : i32
    %c0_i32 = arith.constant 0 : i32
    %2 = arith.minsi %1, %c0_i32 : i32
    %c0_i32_0 = arith.constant 0 : i32
    %c0_i32_1 = arith.constant 0 : i32
    return %2, %c0_i32_0 : i32, i32
  }
  func.func @transform_2(%arg0: i32, %arg1: i32) -> (i32, i32, i32) {
    %c0_i32 = arith.constant 0 : i32
    %c0_i32_0 = arith.constant 0 : i32
    %c0_i32_1 = arith.constant 0 : i32
    return %arg0, %c0_i32, %c0_i32_0 : i32, i32, i32
  }
  func.func @transform_3(%arg0: i32, %arg1: i32) -> (i32, i32, i32) {
    %c0_i32 = arith.constant 0 : i32
    %c0_i32_0 = arith.constant 0 : i32
    %c0_i32_1 = arith.constant 0 : i32
    return %arg0, %c0_i32, %c0_i32_0 : i32, i32, i32
  }
}

</mosaic_0001>

<llo_original>
// kernel: tpu_custom_call.1
$region0: #{tpu_custom_call.1}
  #allocation0 [shape = 'u32[]', space=smem, size = 0x4, offset = 0x4, fixed_abs, tag = 'smem constant byte address 0x4 - core index']
  #allocation1 [shape = 'u32[144,128]{1,0:T(1,128)}', space=vmem, size = 0x12000, scoped, tag = 'internal scratch']
  %s0 = inlined_call_operand.hbm [shape: f32[16,128], index: 0, kind: input, shape index: {}]
  %s1 = inlined_call_operand.hbm [shape: s8[16,128], index: 1, kind: input, shape index: {}]
  %s2 = inlined_call_operand.hbm [shape: f32[2,4,128], index: 2, kind: output, shape index: {0}]
  %s3 = inlined_call_operand.hbm [shape: f32[2,4,128], index: 3, kind: output, shape index: {1}]
  %4 = xla_tuple %s2, %s3
  %s5 = sld [smem:[#allocation0]]
  $region61: #{tpu_custom_call.1} parent=0
    _
  %s7 = ssub.s32 1, %s5
  %s8 = scalar_select 0, %s7, %s5
  $region1: #{tpu_custom_call.1} parent=0
    #allocation2 [shape = 'u8[32768]{0}', space=vmem, size = 0x8000, scoped, tag = 'input window, operand 0']
    #allocation3 [shape = 's32[2]{0}', space=sflag, size = 0x8, scoped, tag = 'scoped memory for tpu_custom_call.1']
    #allocation4 [shape = 's32[2]{0}', space=sflag, size = 0x8, scoped, tag = 'scoped memory for tpu_custom_call.1']
    #allocation5 [shape = 'u8[8192]{0}', space=vmem, size = 0x2000, scoped, tag = 'input window, operand 1']
    #allocation6 [shape = 's32[2]{0}', space=sflag, size = 0x8, scoped, tag = 'scoped memory for tpu_custom_call.1']
    #allocation7 [shape = 'u8[4096]{0}', space=vmem, size = 0x1000, scoped, tag = 'output window, operand 0']
    #allocation8 [shape = 'u8[4096]{0}', space=vmem, size = 0x1000, scoped, tag = 'output window, operand 1']
    #allocation9 [shape = 's32[2]{0}', space=sflag, size = 0x8, scoped, tag = 'scoped memory for tpu_custom_call.1']
    %9 = vsyncpa [#allocation3], 0
    %s10 = scalar_lea.sflag [#allocation3], 1
    %11 = vsyncpa %s10, 0
    %12 = vsyncpa [#allocation6], 0
    %s13 = scalar_lea.sflag [#allocation6], 1
    %14 = vsyncpa %s13, 0
    %15 = vsyncpa [#allocation4], 0
    %s16 = scalar_lea.sflag [#allocation4], 1
    %17 = vsyncpa %s16, 0
    %18 = vsyncpa [#allocation9], 0
    %s19 = scalar_lea.sflag [#allocation9], 1
    %20 = vsyncpa %s19, 0
    loop: start=0, step=1, limit=4
    $region2: #{tpu_custom_call.1} parent=1 // loop_pre_header
      _
    $region3: #{tpu_custom_call.1} parent=1 // loop_header
      %s22 = sphi 0, %s26
      %p23 = scmp.ge.s32.totalorder %s22, 4
      %s29 = sphi 0, %s41
      %s30 = sphi 0, %s37
      %s31 = sphi 0, %s29
      %s32 = sphi 0, %s30
      %s33 = sphi 0, %s31
      %s34 = sphi 0, %s32
      %s50 = sphi 0, %s52
      %s53 = sphi 0, %s50
      %s54 = sphi 0, %s53
      %s70 = sphi 0, %s54
      %s82 = sphi 0, %s84
      %s85 = sphi 0, %s82
      %s86 = sphi 0, %s85
      %s102 = sphi 0, %s86
      %s108 = sphi 0, %s110
      %s111 = sphi 0, %s108
      %s112 = sphi 0, %s111
      %s128 = sphi 0, %s112
      %s134 = sphi 0, %s136
      %s137 = sphi 0, %s134
      %s138 = sphi 0, %s137
      %s154 = sphi 0, %s138
    $region4: #{tpu_custom_call.1} parent=1 // loop_header_branch
      %25 = sbr.rel (%p23) target = $region8
    $region5: #{tpu_custom_call.1} parent=1 // loop_body
      %s27 = ssub.s32 %s22, 1
      %s28 = ssub.s32 %s22, 2
      %s35 = sadd.s32 1, %s30
      %p36 = scmp.ge.s32.totalorder %s35, 1
      %s37 = scalar_select %p36, 0, %s35
      %s38 = sadd.s32 1, %s29
      %s39 = scalar_select %p36, %s38, %s29
      %p40 = scmp.ge.s32.totalorder %s39, 2
      %s41 = scalar_select %p40, 0, %s39
      %s42 = sadd.s32 %s29, %s30
      %p43 = scmp.lt.s32.totalorder %s42, 0
      %s44 = scalar_select %p43, %s42, 0
      %s45 = sadd.s32 %s41, %s37
      %p46 = scmp.lt.s32.totalorder %s45, 0
      %s47 = scalar_select %p46, %s45, 0
      %s48 = ssub.s32 %s44, %s47
      %p49 = scmp.eq.s32.totalorder %s48, 0
      %s51 = sadd.s32 %s50, 1
      %s52 = scalar_select %p49, %s50, %s51
      %p55 = pneg %p49
      %p56 = scmp.eq.s32.totalorder %s22, 1
      %p57 = por %p55, %p56
      %p58 = scmp.ne.s32.totalorder %s50, %s53
      %p59 = scmp.eq.s32.totalorder %s22, 0
      %p60 = por %p58, %p59
      %p61 = scmp.ne.s32.totalorder %s50, %s53
      %p62 = scmp.eq.s32.totalorder %s27, 1
      %p63 = por %p61, %p62
      %p64 = scmp.ne.s32.totalorder %s53, %s54
      %p65 = scmp.eq.s32.totalorder %s27, 0
      %p66 = por %p64, %p65
      %p67 = scmp.ne.s32.totalorder %s53, %s54
      %p68 = scmp.eq.s32.totalorder %s28, 1
      %p69 = por %p67, %p68
      %p71 = scmp.ne.s32.totalorder %s54, %s70
      %p72 = scmp.eq.s32.totalorder %s28, 0
      %p73 = por %p71, %p72
      %s74 = sadd.s32 %s29, %s30
      %p75 = scmp.lt.s32.totalorder %s74, 0
      %s76 = scalar_select %p75, %s74, 0
      %s77 = sadd.s32 %s41, %s37
      %p78 = scmp.lt.s32.totalorder %s77, 0
      %s79 = scalar_select %p78, %s77, 0
      %s80 = ssub.s32 %s76, %s79
      %p81 = scmp.eq.s32.totalorder %s80, 0
      %s83 = sadd.s32 %s82, 1
      %s84 = scalar_select %p81, %s82, %s83
      %p87 = pneg %p81
      %p88 = scmp.eq.s32.totalorder %s22, 1
      %p89 = por %p87, %p88
      %p90 = scmp.ne.s32.totalorder %s82, %s85
      %p91 = scmp.eq.s32.totalorder %s22, 0
      %p92 = por %p90, %p91
      %p93 = scmp.ne.s32.totalorder %s82, %s85
      %p94 = scmp.eq.s32.totalorder %s27, 1
      %p95 = por %p93, %p94
      %p96 = scmp.ne.s32.totalorder %s85, %s86
      %p97 = scmp.eq.s32.totalorder %s27, 0
      %p98 = por %p96, %p97
      %p99 = scmp.ne.s32.totalorder %s85, %s86
      %p100 = scmp.eq.s32.totalorder %s28, 1
      %p101 = por %p99, %p100
      %p103 = scmp.ne.s32.totalorder %s86, %s102
      %p104 = scmp.eq.s32.totalorder %s28, 0
      %p105 = por %p103, %p104
      %s106 = ssub.s32 %s29, %s41
      %p107 = scmp.eq.s32.totalorder %s106, 0
      %s109 = sadd.s32 %s108, 1
      %s110 = scalar_select %p107, %s108, %s109
      %p113 = pneg %p107
      %p114 = scmp.eq.s32.totalorder %s22, 1
      %p115 = por %p113, %p114
      %p116 = scmp.ne.s32.totalorder %s108, %s111
      %p117 = scmp.eq.s32.totalorder %s22, 0
      %p118 = por %p116, %p117
      %p119 = scmp.ne.s32.totalorder %s108, %s111
      %p120 = scmp.eq.s32.totalorder %s27, 1
      %p121 = por %p119, %p120
      %p122 = scmp.ne.s32.totalorder %s111, %s112
      %p123 = scmp.eq.s32.totalorder %s27, 0
      %p124 = por %p122, %p123
      %p125 = scmp.ne.s32.totalorder %s111, %s112
      %p126 = scmp.eq.s32.totalorder %s28, 1
      %p127 = por %p125, %p126
      %p129 = scmp.ne.s32.totalorder %s112, %s128
      %p130 = scmp.eq.s32.totalorder %s28, 0
      %p131 = por %p129, %p130
      %s132 = ssub.s32 %s29, %s41
      %p133 = scmp.eq.s32.totalorder %s132, 0
      %s135 = sadd.s32 %s134, 1
      %s136 = scalar_select %p133, %s134, %s135
      %p139 = pneg %p133
      %p140 = scmp.eq.s32.totalorder %s22, 1
      %p141 = por %p139, %p140
      %p142 = scmp.ne.s32.totalorder %s134, %s137
      %p143 = scmp.eq.s32.totalorder %s22, 0
      %p144 = por %p142, %p143
      %p145 = scmp.ne.s32.totalorder %s134, %s137
      %p146 = scmp.eq.s32.totalorder %s27, 1
      %p147 = por %p145, %p146
      %p148 = scmp.ne.s32.totalorder %s137, %s138
      %p149 = scmp.eq.s32.totalorder %s27, 0
      %p150 = por %p148, %p149
      %p151 = scmp.ne.s32.totalorder %s137, %s138
      %p152 = scmp.eq.s32.totalorder %s28, 1
      %p153 = por %p151, %p152
      %p155 = scmp.ne.s32.totalorder %s138, %s154
      %p156 = scmp.eq.s32.totalorder %s28, 0
      %p157 = por %p155, %p156
      %p158 = scmp.le.s32.totalorder 1, %s22
      %p159 = scmp.lt.s32.totalorder %s22, 3
      %p160 = pnand %p158, %p159
      %p161 = pneg %p160
      // Predicated region
      $region9: #{tpu_custom_call.1} parent=5 // pred_check
        _
      $region10: #{tpu_custom_call.1} parent=5 // pred_check_branch
        %163 = sbr.rel (%p160) target = $region12
      $region11: #{tpu_custom_call.1} parent=5 // pred_region
        %s164 = ssub.s32 %s22, 1
      $region12: #{tpu_custom_call.1} parent=5 // pred_fallthru
        _
      %p165 = scmp.lt.s32.totalorder %s22, 2
      // Predicated region
      $region13: #{tpu_custom_call.1} parent=5 // pred_check
        %p166 = pneg %p165
      $region14: #{tpu_custom_call.1} parent=5 // pred_check_branch
        %168 = sbr.rel (%p166) target = $region16
      $region15: #{tpu_custom_call.1} parent=5 // pred_region
        // Predicated region
        $region17: #{tpu_custom_call.1} parent=15 // pred_check
          %p169 = pneg %p60
        $region18: #{tpu_custom_call.1} parent=15 // pred_check_branch
          %171 = sbr.rel (%p169) target = $region20
        $region19: #{tpu_custom_call.1} parent=15 // pred_region
          %s172 = sand.u32 %s50, 1
          %s173 = scalar_lea.sflag [#allocation3], %s172
          %s174 = sand.u32 %s50, 1
          %s175 = smul.addr %s174, 32
          %s176 = scalar_lea.vmem [#allocation2], %s175
          %s177 = sadd.s32 %s29, %s30
          %p178 = scmp.lt.s32.totalorder %s177, 0
          %s179 = scalar_select %p178, %s177, 0
          %s180 = smul.u32 4, %s179
          %s181 = ssub.s32 2, %s180
          %s182 = smul.u32 128, %s181
          %s184 = ssub.s32 512, %s182
          %185 = vsyncadd %s173, %s184
          %p186 = scmp.ne.s32.totalorder 0, %s182
          %s187 = smul.addr %s180, 128
          %s188 = scalar_lea.hbm %s0, %s187
          %s189 = smul.u32 8, %s181
          %s190 = sshll.u32 %s176, 4
          %s191 = int_to_ptr.vmem [resolvable:$true] %s190
          %s192 = sshll.u32 %s189, 4
          %196 = dma.hbm_to_vmem [thread:$0]  (%p186), %s188, %s192, %s191, %s173, 128, 128, 8
        $region20: #{tpu_custom_call.1} parent=15 // pred_fallthru
          _
        // Predicated region
        $region21: #{tpu_custom_call.1} parent=15 // pred_check
          %p197 = pneg %p92
        $region22: #{tpu_custom_call.1} parent=15 // pred_check_branch
          %199 = sbr.rel (%p197) target = $region24
        $region23: #{tpu_custom_call.1} parent=15 // pred_region
          %s200 = sand.u32 %s82, 1
          %s201 = scalar_lea.sflag [#allocation6], %s200
          %s202 = sand.u32 %s82, 1
          %s203 = smul.addr %s202, 8
          %s204 = scalar_lea.vmem [#allocation5], %s203
          %s205 = sadd.s32 %s29, %s30
          %p206 = scmp.lt.s32.totalorder %s205, 0
          %s207 = scalar_select %p206, %s205, 0
          %s208 = smul.u32 4, %s207
          %s209 = ssub.s32 2, %s208
          %s210 = smul.u32 32, %s209
          %s212 = ssub.s32 128, %s210
          %213 = vsyncadd %s201, %s212
          %p214 = scmp.ne.s32.totalorder 0, %s210
          %s215 = smul.addr %s208, 32
          %s216 = scalar_lea.hbm %s1, %s215
          %s217 = smul.u32 2, %s209
          %s218 = sshll.u32 %s204, 4
          %s219 = int_to_ptr.vmem [resolvable:$true] %s218
          %s220 = sshll.u32 %s217, 4
          %224 = dma.hbm_to_vmem [thread:$0]  (%p214), %s216, %s220, %s219, %s201, 32, 32, 2
        $region24: #{tpu_custom_call.1} parent=15 // pred_fallthru
          _
      $region16: #{tpu_custom_call.1} parent=5 // pred_fallthru
        _
      %p225 = scmp.le.s32.totalorder 1, %s22
      %p226 = scmp.lt.s32.totalorder %s22, 3
      %p227 = pnand %p225, %p226
      %p228 = pneg %p227
      // Predicated region
      $region25: #{tpu_custom_call.1} parent=5 // pred_check
        _
      $region26: #{tpu_custom_call.1} parent=5 // pred_check_branch
        %230 = sbr.rel (%p227) target = $region28
      $region27: #{tpu_custom_call.1} parent=5 // pred_region
        %s231 = ssub.s32 %s22, 1
        %s232 = sand.u32 %s53, 1
        %s233 = scalar_lea.sflag [#allocation3], %s232
        %s234 = sand.u32 %s53, 1
        %s235 = smul.addr %s234, 32
        %s236 = scalar_lea.vmem [#allocation2], %s235
        // Predicated region
        $region29: #{tpu_custom_call.1} parent=27 // pred_check
          %p237 = pneg %p66
        $region30: #{tpu_custom_call.1} parent=27 // pred_check_branch
          %239 = sbr.rel (%p237) target = $region32
        $region31: #{tpu_custom_call.1} parent=27 // pred_region
          %240 = dma.done %s233, 512
        $region32: #{tpu_custom_call.1} parent=27 // pred_fallthru
          _
        %s241 = sand.u32 %s85, 1
        %s242 = scalar_lea.sflag [#allocation6], %s241
        %s243 = sand.u32 %s85, 1
        %s244 = smul.addr %s243, 8
        %s245 = scalar_lea.vmem [#allocation5], %s244
        // Predicated region
        $region33: #{tpu_custom_call.1} parent=27 // pred_check
          %p246 = pneg %p98
        $region34: #{tpu_custom_call.1} parent=27 // pred_check_branch
          %248 = sbr.rel (%p246) target = $region36
        $region35: #{tpu_custom_call.1} parent=27 // pred_region
          %249 = dma.done %s242, 128
        $region36: #{tpu_custom_call.1} parent=27 // pred_fallthru
          _
        %s250 = sand.u32 %s53, 1
        %s251 = scalar_lea.sflag [#allocation3], %s250
        %s252 = sand.u32 %s53, 1
        %s253 = smul.addr %s252, 32
        %s254 = scalar_lea.vmem [#allocation2], %s253
        %p255 = pneg %p66
        %p256 = pneg %p63
        %s257 = sand.u32 %s85, 1
        %s258 = scalar_lea.sflag [#allocation6], %s257
        %s259 = sand.u32 %s85, 1
        %s260 = smul.addr %s259, 8
        %s261 = scalar_lea.vmem [#allocation5], %s260
        %p262 = pneg %p98
        %p263 = pneg %p95
        %p264 = pneg %p124
        %p265 = pneg %p121
        %s266 = sand.u32 %s111, 1
        %s267 = scalar_lea.sflag [#allocation4], %s266
        %s268 = sand.u32 %s111, 1
        %s269 = smul.addr %s268, 4
        %s270 = scalar_lea.vmem [#allocation7], %s269
        %p271 = pneg %p150
        %p272 = pneg %p147
        %s273 = sand.u32 %s137, 1
        %s274 = scalar_lea.sflag [#allocation9], %s273
        %s275 = sand.u32 %s137, 1
        %s276 = smul.addr %s275, 4
        %s277 = scalar_lea.vmem [#allocation8], %s276
        %s278 = sadd.s32 %s31, %s32
        %p279 = scmp.lt.s32.totalorder %s278, 0
        %s280 = scalar_select %p279, %s278, 0
        %s281 = smul.u32 4, %s280
        %s282 = ssub.s32 2, %s281
        %s283 = smul.u32 128, %s282
        %s284 = sadd.s32 %s31, %s32
        %p285 = scmp.lt.s32.totalorder %s284, 0
        %s286 = scalar_select %p285, %s284, 0
        %s287 = smul.u32 4, %s286
        %s288 = ssub.s32 2, %s287
        %s289 = smul.u32 32, %s288
        %p290 = scmp.eq.s32.totalorder %s32, 0
        // Predicated region
        $region37: #{tpu_custom_call.1} parent=27 // pred_check
          %p291 = pneg %p290
        $region38: #{tpu_custom_call.1} parent=27 // pred_check_branch
          %293 = sbr.rel (%p291) target = $region40
        $region39: #{tpu_custom_call.1} parent=27 // pred_region
          %294 = vst [vmem:[%s270] sm:$0xf] 0.0
          %295 = vst [vmem:[%s277] sm:$0xf] 0.0
        $region40: #{tpu_custom_call.1} parent=27 // pred_fallthru
          _
        %v296 = vld [vmem:[%s236] sm:$0xff]
        %v297 = vld [vmem:[%s236 + $0x8] sm:$0xff]
        %v298 = vld [vmem:[%s236 + $0x10] sm:$0xff]
        %v299 = vld [vmem:[%s236 + $0x18] sm:$0xff]
        %v300 = vld [vmem:[%s245] sm:$0x3]
        %v301 = vld [vmem:[%s245 + $0x2] sm:$0x3]
        %v302 = vld [vmem:[%s245 + $0x4] sm:$0x3]
        %v303 = vld [vmem:[%s245 + $0x6] sm:$0x3]
        %v304 = vunpack.c.0.s8 %v300
        %v305 = vunpack.c.0.s8 %v301
        %v306 = vunpack.c.0.s8 %v302
        %v307 = vunpack.c.0.s8 %v303
        %s308 = sadd.s32 %s31, %s32
        %s309 = smul.u32 %s308, 32
        %v310 = vlaneseq
        %v311 = vshrl.u32 %v310, 7
        %v312 = vadd.s32 %v311, 8
        %v313 = vadd.s32 %v311, 16
        %v314 = vadd.s32 %v311, 24
        %s315 = ssub.s32 16, %s309
        %v316 = vstv %s315
        %vm317 = vcmp.lt.s32.totalorder %v311, %v316
        %vm318 = vcmp.lt.s32.totalorder %v312, %v316
        %vm319 = vcmp.lt.s32.totalorder %v313, %v316
        %vm320 = vcmp.lt.s32.totalorder %v314, %v316
        %v321 = vsel %vm317, %v304, 4294967295
        %v322 = vsel %vm318, %v305, 4294967295
        %v323 = vsel %vm319, %v306, 4294967295
        %v324 = vsel %vm320, %v307, 4294967295
        %v325 = vcvt.s32.f32 %v321
        %v326 = vcvt.s32.f32 %v322
        %v327 = vcvt.s32.f32 %v323
        %v328 = vcvt.s32.f32 %v324
        %v329 = vsub.f32 %v296, %v325
        %v330 = vsub.f32 %v297, %v326
        %v331 = vsub.f32 %v298, %v327
        %v332 = vsub.f32 %v299, %v328
        %v333 = vand.u32 2147483647, %v329
        %v334 = vand.u32 2147483647, %v330
        %v335 = vand.u32 2147483647, %v331
        %v336 = vand.u32 2147483647, %v332
        %v337 = vsel %vm317, %v333, 0.0
        %v338 = vsel %vm318, %v334, 0.0
        %v339 = vsel %vm319, %v335, 0.0
        %v340 = vsel %vm320, %v336, 0.0
        %vm341 = vcmp.eq.s32.totalorder %v321, 0
        %vm342 = vcmp.eq.s32.totalorder %v322, 0
        %vm343 = vcmp.eq.s32.totalorder %v323, 0
        %vm344 = vcmp.eq.s32.totalorder %v324, 0
        %v345 = vsel %vm341, 1, 0
        %v346 = vsel %vm342, 1, 0
        %v347 = vsel %vm343, 1, 0
        %v348 = vsel %vm344, 1, 0
        %v349 = vcvt.s32.f32 %v345
        %v350 = vcvt.s32.f32 %v346
        %v351 = vcvt.s32.f32 %v347
        %v352 = vcvt.s32.f32 %v348
        %v353 = vmul.f32 %v349, %v337
        %v354 = vmul.f32 %v350, %v338
        %v355 = vmul.f32 %v351, %v339
        %v356 = vmul.f32 %v352, %v340
        %v357 = vadd.f32 %v353, %v354
        %v358 = vadd.f32 %v357, %v355
        %v359 = vadd.f32 %v358, %v356
        %v360 = vrot.slane %v359, 4
        %v361 = vadd.f32 %v359, %v360
        %v362 = vrot.slane %v361, 2
        %v363 = vadd.f32 %v361, %v362
        %v364 = vrot.slane %v363, 1
        %v365 = vadd.f32 %v363, %v364
        %v366 = vadd.f32 %v349, %v350
        %v367 = vadd.f32 %v366, %v351
        %v368 = vadd.f32 %v367, %v352
        %v369 = vrot.slane %v368, 4
        %v370 = vadd.f32 %v368, %v369
        %v371 = vrot.slane %v370, 2
        %v372 = vadd.f32 %v370, %v371
        %v373 = vrot.slane %v372, 1
        %v374 = vadd.f32 %v372, %v373
        %vm375 = vcmp.eq.s32.totalorder %v321, 1
        %vm376 = vcmp.eq.s32.totalorder %v322, 1
        %vm377 = vcmp.eq.s32.totalorder %v323, 1
        %vm378 = vcmp.eq.s32.totalorder %v324, 1
        %v379 = vsel %vm375, 1, 0
        %v380 = vsel %vm376, 1, 0
        %v381 = vsel %vm377, 1, 0
        %v382 = vsel %vm378, 1, 0
        %v383 = vcvt.s32.f32 %v379
        %v384 = vcvt.s32.f32 %v380
        %v385 = vcvt.s32.f32 %v381
        %v386 = vcvt.s32.f32 %v382
        %v387 = vmul.f32 %v383, %v337
        %v388 = vmul.f32 %v384, %v338
        %v389 = vmul.f32 %v385, %v339
        %v390 = vmul.f32 %v386, %v340
        %v391 = vadd.f32 %v387, %v388
        %v392 = vadd.f32 %v391, %v389
        %v393 = vadd.f32 %v392, %v390
        %v394 = vrot.slane %v393, 4
        %v395 = vadd.f32 %v393, %v394
        %v396 = vrot.slane %v395, 2
        %v397 = vadd.f32 %v395, %v396
        %v398 = vrot.slane %v397, 1
        %v399 = vadd.f32 %v397, %v398
        %v400 = vadd.f32 %v383, %v384
        %v401 = vadd.f32 %v400, %v385
        %v402 = vadd.f32 %v401, %v386
        %v403 = vrot.slane %v402, 4
        %v404 = vadd.f32 %v402, %v403
        %v405 = vrot.slane %v404, 2
        %v406 = vadd.f32 %v404, %v405
        %v407 = vrot.slane %v406, 1
        %v408 = vadd.f32 %v406, %v407
        %vm409 = vcmp.eq.s32.totalorder %v321, 2
        %vm410 = vcmp.eq.s32.totalorder %v322, 2
        %vm411 = vcmp.eq.s32.totalorder %v323, 2
        %vm412 = vcmp.eq.s32.totalorder %v324, 2
        %v413 = vsel %vm409, 1, 0
        %v414 = vsel %vm410, 1, 0
        %v415 = vsel %vm411, 1, 0
        %v416 = vsel %vm412, 1, 0
        %v417 = vcvt.s32.f32 %v413
        %v418 = vcvt.s32.f32 %v414
        %v419 = vcvt.s32.f32 %v415
        %v420 = vcvt.s32.f32 %v416
        %v421 = vmul.f32 %v417, %v337
        %v422 = vmul.f32 %v418, %v338
        %v423 = vmul.f32 %v419, %v339
        %v424 = vmul.f32 %v420, %v340
        %v425 = vadd.f32 %v421, %v422
        %v426 = vadd.f32 %v425, %v423
        %v427 = vadd.f32 %v426, %v424
        %v428 = vrot.slane %v427, 4
        %v429 = vadd.f32 %v427, %v428
        %v430 = vrot.slane %v429, 2
        %v431 = vadd.f32 %v429, %v430
        %v432 = vrot.slane %v431, 1
        %v433 = vadd.f32 %v431, %v432
        %v434 = vadd.f32 %v417, %v418
        %v435 = vadd.f32 %v434, %v419
        %v436 = vadd.f32 %v435, %v420
        %v437 = vrot.slane %v436, 4
        %v438 = vadd.f32 %v436, %v437
        %v439 = vrot.slane %v438, 2
        %v440 = vadd.f32 %v438, %v439
        %v441 = vrot.slane %v440, 1
        %v442 = vadd.f32 %v440, %v441
        %vm443 = vcmp.eq.s32.totalorder %v321, 3
        %vm444 = vcmp.eq.s32.totalorder %v322, 3
        %vm445 = vcmp.eq.s32.totalorder %v323, 3
        %vm446 = vcmp.eq.s32.totalorder %v324, 3
        %v447 = vsel %vm443, 1, 0
        %v448 = vsel %vm444, 1, 0
        %v449 = vsel %vm445, 1, 0
        %v450 = vsel %vm446, 1, 0
        %v451 = vcvt.s32.f32 %v447
        %v452 = vcvt.s32.f32 %v448
        %v453 = vcvt.s32.f32 %v449
        %v454 = vcvt.s32.f32 %v450
        %v455 = vmul.f32 %v451, %v337
        %v456 = vmul.f32 %v452, %v338
        %v457 = vmul.f32 %v453, %v339
        %v458 = vmul.f32 %v454, %v340
        %v459 = vadd.f32 %v455, %v456
        %v460 = vadd.f32 %v459, %v457
        %v461 = vadd.f32 %v460, %v458
        %v462 = vrot.slane %v461, 4
        %v463 = vadd.f32 %v461, %v462
        %v464 = vrot.slane %v463, 2
        %v465 = vadd.f32 %v463, %v464
        %v466 = vrot.slane %v465, 1
        %v467 = vadd.f32 %v465, %v466
        %v468 = vadd.f32 %v451, %v452
        %v469 = vadd.f32 %v468, %v453
        %v470 = vadd.f32 %v469, %v454
        %v471 = vrot.slane %v470, 4
        %v472 = vadd.f32 %v470, %v471
        %v473 = vrot.slane %v472, 2
        %v474 = vadd.f32 %v472, %v473
        %v475 = vrot.slane %v474, 1
        %v476 = vadd.f32 %v474, %v475
        %v477 = vld [vmem:[%s270] sm:$0xf]
        %vm478 = vcmask 1040384
        %v479 = vsel %vm478, %v365, %v399
        %vm480 = vcmask 1041408
        %v481 = vsel %vm480, %v479, %v433
        %vm482 = vcmask 1042432
        %v483 = vsel %vm482, %v481, %v467
        %v484 = vadd.f32 %v477, %v483
        %485 = vst [vmem:[%s270] sm:$0xf] %v484
        %v486 = vld [vmem:[%s277] sm:$0xf]
        %v487 = vsel %vm478, %v374, %v408
        %v488 = vsel %vm480, %v487, %v442
        %v489 = vsel %vm482, %v488, %v476
        %v490 = vadd.f32 %v486, %v489
        %491 = vst [vmem:[%s277] sm:$0xf] %v490
        %s492 = sand.u32 %s111, 1
        %s493 = scalar_lea.sflag [#allocation4], %s492
        %s494 = sand.u32 %s111, 1
        %s495 = smul.addr %s494, 4
        %s496 = scalar_lea.vmem [#allocation7], %s495
        %s497 = sand.u32 %s137, 1
        %s498 = scalar_lea.sflag [#allocation9], %s497
        %s499 = sand.u32 %s137, 1
        %s500 = smul.addr %s499, 4
        %s501 = scalar_lea.vmem [#allocation8], %s500
        // Predicated region
        $region41: #{tpu_custom_call.1} parent=27 // pred_check
          %p502 = pneg %p121
        $region42: #{tpu_custom_call.1} parent=27 // pred_check_branch
          %504 = sbr.rel (%p502) target = $region44
        $region43: #{tpu_custom_call.1} parent=27 // pred_region
          %s506 = ssub.s32 64, 64
          %507 = vsyncadd %s493, %s506
          %s508 = smul.addr %s31, 64
          %s509 = scalar_lea.hbm %s2, %s508
          %s511 = sshll.u32 %s496, 4
          %s512 = int_to_ptr.vmem [resolvable:$true] %s511
          %514 = dma.vmem_to_hbm [thread:$0]  %s512, 64, %s509, %s493
        $region44: #{tpu_custom_call.1} parent=27 // pred_fallthru
          _
        // Predicated region
        $region45: #{tpu_custom_call.1} parent=27 // pred_check
          %p515 = pneg %p147
        $region46: #{tpu_custom_call.1} parent=27 // pred_check_branch
          %517 = sbr.rel (%p515) target = $region48
        $region47: #{tpu_custom_call.1} parent=27 // pred_region
          %s519 = ssub.s32 64, 64
          %520 = vsyncadd %s498, %s519
          %s521 = smul.addr %s31, 64
          %s522 = scalar_lea.hbm %s3, %s521
          %s524 = sshll.u32 %s501, 4
          %s525 = int_to_ptr.vmem [resolvable:$true] %s524
          %527 = dma.vmem_to_hbm [thread:$0]  %s525, 64, %s522, %s498
        $region48: #{tpu_custom_call.1} parent=27 // pred_fallthru
          _
      $region28: #{tpu_custom_call.1} parent=5 // pred_fallthru
        _
      %p528 = scmp.le.s32.totalorder 2, %s22
      // Predicated region
      $region49: #{tpu_custom_call.1} parent=5 // pred_check
        %p529 = pneg %p528
      $region50: #{tpu_custom_call.1} parent=5 // pred_check_branch
        %531 = sbr.rel (%p529) target = $region52
      $region51: #{tpu_custom_call.1} parent=5 // pred_region
        %s532 = ssub.s32 %s22, 2
        // Predicated region
        $region53: #{tpu_custom_call.1} parent=51 // pred_check
          %p533 = pneg %p127
        $region54: #{tpu_custom_call.1} parent=51 // pred_check_branch
          %535 = sbr.rel (%p533) target = $region56
        $region55: #{tpu_custom_call.1} parent=51 // pred_region
          %s536 = sand.u32 %s112, 1
          %s537 = scalar_lea.sflag [#allocation4], %s536
          %s538 = sand.u32 %s112, 1
          %s539 = smul.addr %s538, 4
          %s540 = scalar_lea.vmem [#allocation7], %s539
          %541 = dma.done %s537, 64
        $region56: #{tpu_custom_call.1} parent=51 // pred_fallthru
          _
        // Predicated region
        $region57: #{tpu_custom_call.1} parent=51 // pred_check
          %p542 = pneg %p153
        $region58: #{tpu_custom_call.1} parent=51 // pred_check_branch
          %544 = sbr.rel (%p542) target = $region60
        $region59: #{tpu_custom_call.1} parent=51 // pred_region
          %s545 = sand.u32 %s138, 1
          %s546 = scalar_lea.sflag [#allocation9], %s545
          %s547 = sand.u32 %s138, 1
          %s548 = smul.addr %s547, 4
          %s549 = scalar_lea.vmem [#allocation8], %s548
          %550 = dma.done %s546, 64
        $region60: #{tpu_custom_call.1} parent=51 // pred_fallthru
          _
      $region52: #{tpu_custom_call.1} parent=5 // pred_fallthru
        _
    $region6: #{tpu_custom_call.1} parent=1 // loop_footer
      %s26 = sadd.s32 1, %s22
    $region7: #{tpu_custom_call.1} parent=1 // loop_footer_branch
      %21 = sbr.rel target = $region3
    $region8: #{tpu_custom_call.1} parent=1 // loop_exit
      _
    %551 = vsyncpa [#allocation3], 1
    %s552 = scalar_lea.sflag [#allocation3], 1
    %553 = vsyncpa %s552, 1
    %554 = vsyncpa [#allocation6], 1
    %s555 = scalar_lea.sflag [#allocation6], 1
    %556 = vsyncpa %s555, 1
    %557 = vsyncpa [#allocation4], 1
    %s558 = scalar_lea.sflag [#allocation4], 1
    %559 = vsyncpa %s558, 1
    %560 = vsyncpa [#allocation9], 1
    %s561 = scalar_lea.sflag [#allocation9], 1
    %562 = vsyncpa %s561, 1

</llo_original>
